<compile_context>
chip_gen: v5e
topology: v5e:2x2
jax: 0.10.0
libtpu: 0.0.40
codegen_flags: <defaults>
</compile_context>

<pallas_src>
import functools

import jax
import jax.numpy as jnp
from jax.experimental import pallas as pl
from jax.experimental.pallas import tpu as pltpu


def _round_up(n, m):
    return ((n + m - 1) // m) * m


def _pad_to(a, shape):
    return jnp.pad(a, [(0, t - s) for s, t in zip(a.shape, shape)])


# ---------------------------------------------------------------------------
# Kernel
# ---------------------------------------------------------------------------
def _dqn_kernel(x_ref, w1_ref, b1_ref, w2_ref, b2_ref, w3_ref, b3_ref, o_ref):
    # x_ref: (TILE_B, in_states) f32 (unpadded lanes); weights bf16, resident in
    # VMEM across all grid steps; biases f32; output f32, lane-dense (128-padded).
    x = x_ref[...].astype(jnp.bfloat16)  # bf16 MXU inputs, f32 accumulation

    # fc1 + ReLU
    h1 = jnp.dot(x, w1_ref[...], preferred_element_type=jnp.float32)
    h1 = jnp.maximum(h1 + b1_ref[...], 0.0)

    # fc2 + ReLU
    h2 = jnp.dot(h1.astype(jnp.bfloat16), w2_ref[...],
                 preferred_element_type=jnp.float32)
    h2 = jnp.maximum(h2 + b2_ref[...], 0.0)

    # out (no activation)
    out = jnp.dot(h2.astype(jnp.bfloat16), w3_ref[...],
                  preferred_element_type=jnp.float32)
    o_ref[...] = (out + b3_ref[...]).astype(o_ref.dtype)


# ---------------------------------------------------------------------------
# One-time parameter preparation (hoisted out of the per-step wrapper)
# ---------------------------------------------------------------------------
def prepare_dqn_params(params):
    """Pad hidden/output dims to 128 lanes and cast weights to bf16, once.

    Zero padding is exact through every matmul/ReLU and is sliced off at the end.
    The (small) in_states contraction dim of fc1 is intentionally NOT padded.
    """
    w1, b1 = params["w1"], params["b1"]
    w2, b2 = params["w2"], params["b2"]
    w3, b3 = params["w3"], params["b3"]
    in_states, h1_nodes = w1.shape
    out_actions = w3.shape[1]
    hp = _round_up(h1_nodes, 128)
    ap = _round_up(out_actions, 128)
    return dict(
        w1=_pad_to(w1, (in_states, hp)).astype(jnp.bfloat16),
        b1=_pad_to(b1, (1, hp)).astype(jnp.float32),
        w2=_pad_to(w2, (hp, hp)).astype(jnp.bfloat16),
        b2=_pad_to(b2, (1, hp)).astype(jnp.float32),
        w3=_pad_to(w3, (hp, ap)).astype(jnp.bfloat16),
        b3=_pad_to(b3, (1, ap)).astype(jnp.float32),
    )


# ---------------------------------------------------------------------------
# Forward wrapper
# ---------------------------------------------------------------------------
@functools.partial(jax.jit, static_argnames=("out_actions", "tile_b"))
def dqn_forward(x, prepared, *, out_actions, tile_b=512):
    """x: (batch, in_states) f32. `prepared`: output of prepare_dqn_params."""
    w1, b1 = prepared["w1"], prepared["b1"]
    w2, b2 = prepared["w2"], prepared["b2"]
    w3, b3 = prepared["w3"], prepared["b3"]

    batch, in_states = x.shape
    hp = w1.shape[1]
    ap = w3.shape[1]

    # Batch tiling: sublane-aligned and, when the batch allows it, at least two
    # grid steps so dimension_semantics=("parallel",) can use both v7x cores.
    bp0 = _round_up(batch, 8)
    if bp0 > 8:
        tb = min(tile_b, max(8, _round_up(-(-bp0 // 2), 8)))
    else:
        tb = bp0
    bp = _round_up(bp0, tb)

    # Only batch padding of x per call (no lane pad, no dtype cast in HBM).
    x_p = x if bp == batch else jnp.pad(x, ((0, bp - batch), (0, 0)))

    grid = (bp // tb,)

    def resident(shape):
        # Same block every grid step -> stays resident in VMEM; constant blocks
        # don't need double buffering, so request a single buffer.
        return pl.BlockSpec(shape, lambda i: (0, 0), pipeline_mode=pl.Buffered(1))

    # VMEM: single-buffered resident weights/biases + double-buffered x/out tiles.
    weight_bytes = (in_states * hp + hp * hp + hp * ap) * 2 + (2 * hp + ap) * 4
    act_bytes = 2 * (tb * in_states * 4 + tb * ap * 4)
    needed = weight_bytes + act_bytes
    try:
        vmem_cap = int(pltpu.get_tpu_info().vmem_capacity_bytes)
    except Exception:  # conservative fallback if the query is unavailable
        vmem_cap = 64 * 1024 * 1024
    vmem_limit = int(min(max(2 * needed, 16 * 1024 * 1024), (vmem_cap * 3) // 4))
    # NOTE: for extremely large h1_nodes (hp >= ~5120 on v7x) a K-tiled streaming
    # path for w2 would be needed; DQN hidden sizes stay far below that.

    flops = 2 * bp * (in_states * hp + hp * hp + hp * ap)
    bytes_accessed = (x_p.size * 4
                      + (w1.size + w2.size + w3.size) * 2
                      + (b1.size + b2.size + b3.size) * 4
                      + bp * ap * 4)

    out_p = pl.pallas_call(
        _dqn_kernel,
        out_shape=jax.ShapeDtypeStruct((bp, ap), jnp.float32),
        grid=grid,
        in_specs=[
            pl.BlockSpec((tb, in_states), lambda i: (i, 0)),   # x: tiled over batch
            resident((in_states, hp)), resident((1, hp)),      # fc1
            resident((hp, hp)), resident((1, hp)),             # fc2
            resident((hp, ap)), resident((1, ap)),             # out
        ],
        out_specs=pl.BlockSpec((tb, ap), lambda i: (i, 0)),
        compiler_params=pltpu.CompilerParams(
            dimension_semantics=("parallel",),   # v7x: shard batch over 2 TCs
            vmem_limit_bytes=vmem_limit,
        ),
        cost_estimate=pl.CostEstimate(
            flops=flops, transcendentals=0, bytes_accessed=bytes_accessed),
    )(x_p, w1, b1, w2, b2, w3, b3)

    # Slice the lane-dense padded output back to the logical shape.
    return out_p[:batch, :out_actions]


# ---------------------------------------------------------------------------
# Init / reference
# ---------------------------------------------------------------------------
def init_dqn_params(key, in_states, h1_nodes, out_actions):
    """nn.Linear-style init (uniform +/- 1/sqrt(fan_in)); weights stored (in, out)."""
    ks = jax.random.split(key, 6)

    def layer(kw, kb, fan_in, fan_out):
        bound = 1.0 / jnp.sqrt(fan_in)
        w = jax.random.uniform(kw, (fan_in, fan_out), jnp.float32, -bound, bound)
        b = jax.random.uniform(kb, (1, fan_out), jnp.float32, -bound, bound)
        return w, b

    w1, b1 = layer(ks[0], ks[1], in_states, h1_nodes)
    w2, b2 = layer(ks[2], ks[3], h1_nodes, h1_nodes)
    w3, b3 = layer(ks[4], ks[5], h1_nodes, out_actions)
    return dict(w1=w1, b1=b1, w2=w2, b2=b2, w3=w3, b3=b3)


def dqn_reference(x, p):
    h1 = jnp.maximum(x @ p["w1"] + p["b1"], 0.0)
    h2 = jnp.maximum(h1 @ p["w2"] + p["b2"], 0.0)
    return h2 @ p["w3"] + p["b3"]


if __name__ == "__main__":
    in_states, h1_nodes, out_actions = 8, 32, 4
    batch = 2

    key = jax.random.PRNGKey(0)
    k_params, k_x = jax.random.split(key)
    params = init_dqn_params(k_params, in_states, h1_nodes, out_actions)
    prepared = prepare_dqn_params(params)        # one-time pad + bf16 cast
    x = jax.random.normal(k_x, (batch, in_states), jnp.float32)

    out = dqn_forward(x, prepared, out_actions=out_actions)
    out = jax.block_until_ready(out)

    ref = dqn_reference(x, params)
    assert out.shape == (batch, out_actions)
    # bf16 MXU inputs with f32 accumulation -> loose tolerance vs pure-f32 reference.
    assert jnp.allclose(out, ref, atol=2e-2, rtol=2e-2), (out, ref)

    print("KERNEL_OK")
</pallas_src>

<mosaic_0001>
module attributes {stable_mosaic.version = 11 : i64} {
  func.func @_dqn_kernel(%arg0: i32, %arg1: memref<8x8xf32, #tpu.memory_space<vmem>>, %arg2: memref<8x128xbf16, #tpu.memory_space<vmem>>, %arg3: memref<1x128xf32, #tpu.memory_space<vmem>>, %arg4: memref<128x128xbf16, #tpu.memory_space<vmem>>, %arg5: memref<1x128xf32, #tpu.memory_space<vmem>>, %arg6: memref<128x128xbf16, #tpu.memory_space<vmem>>, %arg7: memref<1x128xf32, #tpu.memory_space<vmem>>, %arg8: memref<8x128xf32, #tpu.memory_space<vmem>>) attributes {dimension_semantics = [#tpu.dimension_semantics<parallel>], iteration_bounds = array<i64: 1>, scalar_prefetch = 0 : i64, scratch_operands = 0 : i64, tpu.core_type = #tpu.core_type<tc>, window_params = [{transform_indices = @transform_0, window_bounds = array<i64: 8, 8>}, {pipeline_mode = #tpu.pipeline_mode<synchronous>, transform_indices = @transform_1, window_bounds = array<i64: 8, 128>}, {pipeline_mode = #tpu.pipeline_mode<synchronous>, transform_indices = @transform_2, window_bounds = array<i64: 1, 128>}, {pipeline_mode = #tpu.pipeline_mode<synchronous>, transform_indices = @transform_3, window_bounds = array<i64: 128, 128>}, {pipeline_mode = #tpu.pipeline_mode<synchronous>, transform_indices = @transform_4, window_bounds = array<i64: 1, 128>}, {pipeline_mode = #tpu.pipeline_mode<synchronous>, transform_indices = @transform_5, window_bounds = array<i64: 128, 128>}, {pipeline_mode = #tpu.pipeline_mode<synchronous>, transform_indices = @transform_6, window_bounds = array<i64: 1, 128>}, {transform_indices = @transform_7, window_bounds = array<i64: 8, 128>}]} {
    %c0 = arith.constant 0 : index
    %c0_0 = arith.constant 0 : index
    %0 = vector.load %arg1[%c0, %c0_0] : memref<8x8xf32, #tpu.memory_space<vmem>>, vector<8x8xf32>
    %1 = arith.truncf %0 : vector<8x8xf32> to vector<8x8xbf16>
    %c0_1 = arith.constant 0 : index
    %c0_2 = arith.constant 0 : index
    %2 = vector.load %arg2[%c0_1, %c0_2] : memref<8x128xbf16, #tpu.memory_space<vmem>>, vector<8x128xbf16>
    %cst = arith.constant dense<0.000000e+00> : vector<8x128xf32>
    %3 = tpu.matmul %1, %2, %cst {dimension_numbers = #tpu.dot_dimension_numbers<[1], [0], [0], [1], [0, 0, 1, 1], [], []>} : vector<8x8xbf16>, vector<8x128xbf16>, vector<8x128xf32> -> vector<8x128xf32>
    %c0_3 = arith.constant 0 : index
    %c0_4 = arith.constant 0 : index
    %4 = vector.load %arg3[%c0_3, %c0_4] : memref<1x128xf32, #tpu.memory_space<vmem>>, vector<1x128xf32>
    %5 = vector.broadcast %4 : vector<1x128xf32> to vector<8x128xf32>
    %6 = arith.addf %3, %5 : vector<8x128xf32>
    %cst_5 = arith.constant 0.000000e+00 : f32
    %7 = vector.broadcast %cst_5 : f32 to vector<8x128xf32>
    %8 = arith.maximumf %6, %7 : vector<8x128xf32>
    %9 = arith.truncf %8 : vector<8x128xf32> to vector<8x128xbf16>
    %c0_6 = arith.constant 0 : index
    %c0_7 = arith.constant 0 : index
    %10 = vector.load %arg4[%c0_6, %c0_7] : memref<128x128xbf16, #tpu.memory_space<vmem>>, vector<128x128xbf16>
    %cst_8 = arith.constant dense<0.000000e+00> : vector<8x128xf32>
    %11 = tpu.matmul %9, %10, %cst_8 {dimension_numbers = #tpu.dot_dimension_numbers<[1], [0], [0], [1], [0, 0, 1, 1], [], []>} : vector<8x128xbf16>, vector<128x128xbf16>, vector<8x128xf32> -> vector<8x128xf32>
    %c0_9 = arith.constant 0 : index
    %c0_10 = arith.constant 0 : index
    %12 = vector.load %arg5[%c0_9, %c0_10] : memref<1x128xf32, #tpu.memory_space<vmem>>, vector<1x128xf32>
    %13 = vector.broadcast %12 : vector<1x128xf32> to vector<8x128xf32>
    %14 = arith.addf %11, %13 : vector<8x128xf32>
    %cst_11 = arith.constant 0.000000e+00 : f32
    %15 = vector.broadcast %cst_11 : f32 to vector<8x128xf32>
    %16 = arith.maximumf %14, %15 : vector<8x128xf32>
    %17 = arith.truncf %16 : vector<8x128xf32> to vector<8x128xbf16>
    %c0_12 = arith.constant 0 : index
    %c0_13 = arith.constant 0 : index
    %18 = vector.load %arg6[%c0_12, %c0_13] : memref<128x128xbf16, #tpu.memory_space<vmem>>, vector<128x128xbf16>
    %cst_14 = arith.constant dense<0.000000e+00> : vector<8x128xf32>
    %19 = tpu.matmul %17, %18, %cst_14 {dimension_numbers = #tpu.dot_dimension_numbers<[1], [0], [0], [1], [0, 0, 1, 1], [], []>} : vector<8x128xbf16>, vector<128x128xbf16>, vector<8x128xf32> -> vector<8x128xf32>
    %c0_15 = arith.constant 0 : index
    %c0_16 = arith.constant 0 : index
    %20 = vector.load %arg7[%c0_15, %c0_16] : memref<1x128xf32, #tpu.memory_space<vmem>>, vector<1x128xf32>
    %21 = vector.broadcast %20 : vector<1x128xf32> to vector<8x128xf32>
    %22 = arith.addf %19, %21 : vector<8x128xf32>
    %c0_17 = arith.constant 0 : index
    %c0_18 = arith.constant 0 : index
    %23 = vector.load %arg8[%c0_17, %c0_18] : memref<8x128xf32, #tpu.memory_space<vmem>>, vector<8x128xf32>
    tpu.vector_store %arg8[%c0_17, %c0_18], %22 {strides = array<i32>} : memref<8x128xf32, #tpu.memory_space<vmem>>, vector<8x128xf32>,
    return
  }
  func.func @transform_0(%arg0: i32) -> (i32, i32) {
    %c0_i32 = arith.constant 0 : i32
    %c0_i32_0 = arith.constant 0 : i32
    return %arg0, %c0_i32 : i32, i32
  }
  func.func @transform_1(%arg0: i32) -> (i32, i32) {
    %c0_i32 = arith.constant 0 : i32
    %c0_i32_0 = arith.constant 0 : i32
    %c0_i32_1 = arith.constant 0 : i32
    return %c0_i32, %c0_i32_0 : i32, i32
  }
  func.func @transform_2(%arg0: i32) -> (i32, i32) {
    %c0_i32 = arith.constant 0 : i32
    %c0_i32_0 = arith.constant 0 : i32
    %c0_i32_1 = arith.constant 0 : i32
    return %c0_i32, %c0_i32_0 : i32, i32
  }
  func.func @transform_3(%arg0: i32) -> (i32, i32) {
    %c0_i32 = arith.constant 0 : i32
    %c0_i32_0 = arith.constant 0 : i32
    %c0_i32_1 = arith.constant 0 : i32
    return %c0_i32, %c0_i32_0 : i32, i32
  }
  func.func @transform_4(%arg0: i32) -> (i32, i32) {
    %c0_i32 = arith.constant 0 : i32
    %c0_i32_0 = arith.constant 0 : i32
    %c0_i32_1 = arith.constant 0 : i32
    return %c0_i32, %c0_i32_0 : i32, i32
  }
  func.func @transform_5(%arg0: i32) -> (i32, i32) {
    %c0_i32 = arith.constant 0 : i32
    %c0_i32_0 = arith.constant 0 : i32
    %c0_i32_1 = arith.constant 0 : i32
    return %c0_i32, %c0_i32_0 : i32, i32
  }
  func.func @transform_6(%arg0: i32) -> (i32, i32) {
    %c0_i32 = arith.constant 0 : i32
    %c0_i32_0 = arith.constant 0 : i32
    %c0_i32_1 = arith.constant 0 : i32
    return %c0_i32, %c0_i32_0 : i32, i32
  }
  func.func @transform_7(%arg0: i32) -> (i32, i32) {
    %c0_i32 = arith.constant 0 : i32
    %c0_i32_0 = arith.constant 0 : i32
    return %arg0, %c0_i32 : i32, i32
  }
}

</mosaic_0001>

<llo_original>
// kernel: dqn_forward.1
$region0: #{dqn_forward.1}
  #allocation0 [shape = 'u32[]', space=smem, size = 0x4, offset = 0x4, fixed_abs, tag = 'smem constant byte address 0x4 - core index']
  #allocation1 [shape = 'u32[72,128]{1,0:T(1,128)}', space=vmem, size = 0x9000, scoped, tag = 'internal scratch']
  %s0 = inlined_call_operand.vmem [shape: f32[8,8], index: 0, kind: input, shape index: {}]
  %s1 = inlined_call_operand.vmem [shape: bf16[8,128], index: 1, kind: input, shape index: {}]
  %s2 = inlined_call_operand.vmem [shape: f32[1,128], index: 2, kind: input, shape index: {}]
  %s3 = inlined_call_operand.hbm [shape: bf16[128,128], index: 3, kind: input, shape index: {}]
  %s4 = inlined_call_operand.vmem [shape: f32[1,128], index: 4, kind: input, shape index: {}]
  %s5 = inlined_call_operand.hbm [shape: bf16[128,128], index: 5, kind: input, shape index: {}]
  %s6 = inlined_call_operand.vmem [shape: f32[1,128], index: 6, kind: input, shape index: {}]
  %s7 = inlined_call_operand.vmem [shape: f32[8,128], index: 7, kind: output, shape index: {}]
  %s8 = sld [smem:[#allocation0]]
  $region46: #{dqn_forward.1} parent=0
    _
  %s10 = ssub.s32 1, %s8
  %s11 = scalar_select 0, %s10, %s8
  $region1: #{dqn_forward.1} parent=0
    #allocation2 [shape = 'u8[32768]{0}', space=vmem, size = 0x8000, scoped, tag = 'input window, operand 3, single buffered']
    #allocation3 [shape = 's32[1]{0}', space=sflag, size = 0x4, scoped, tag = 'scoped memory for dqn_forward.1']
    #allocation4 [shape = 'u8[32768]{0}', space=vmem, size = 0x8000, scoped, tag = 'input window, operand 5, single buffered']
    #allocation5 [shape = 's32[1]{0}', space=sflag, size = 0x4, scoped, tag = 'scoped memory for dqn_forward.1']
    %12 = vsyncpa [#allocation3], 0
    %13 = vsyncpa [#allocation5], 0
    // Predicated region
    $region2: #{dqn_forward.1} parent=1 // pred_check
      _
    $region3: #{dqn_forward.1} parent=1 // pred_check_branch
      %15 = sbr.rel (0) target = $region5
    $region4: #{dqn_forward.1} parent=1 // pred_region
      _
    $region5: #{dqn_forward.1} parent=1 // pred_fallthru
      _
    // Predicated region
    $region6: #{dqn_forward.1} parent=1 // pred_check
      _
    $region7: #{dqn_forward.1} parent=1 // pred_check_branch
      %17 = sbr.rel (0) target = $region9
    $region8: #{dqn_forward.1} parent=1 // pred_region
      _
    $region9: #{dqn_forward.1} parent=1 // pred_fallthru
      _
    // Predicated region
    $region10: #{dqn_forward.1} parent=1 // pred_check
      _
    $region11: #{dqn_forward.1} parent=1 // pred_check_branch
      %19 = sbr.rel (0) target = $region13
    $region12: #{dqn_forward.1} parent=1 // pred_region
      _
    $region13: #{dqn_forward.1} parent=1 // pred_fallthru
      _
    // Predicated region
    $region14: #{dqn_forward.1} parent=1 // pred_check
      _
    $region15: #{dqn_forward.1} parent=1 // pred_check_branch
      %21 = sbr.rel (0) target = $region17
    $region16: #{dqn_forward.1} parent=1 // pred_region
      %23 = vsyncadd [#allocation3], 0
      %s24 = sshll.u32 %s3, 4
      %s25 = int_to_ptr.hbm [resolvable:$true] %s24
      %s26 = sshll.u32 [#allocation2], 4
      %s27 = int_to_ptr.vmem [resolvable:$true] %s26
      %32 = dma.hbm_to_vmem [thread:$0]  %s25, 1024, %s27, [#allocation3], 64, 64, 4
    $region17: #{dqn_forward.1} parent=1 // pred_fallthru
      _
    // Predicated region
    $region18: #{dqn_forward.1} parent=1 // pred_check
      _
    $region19: #{dqn_forward.1} parent=1 // pred_check_branch
      %34 = sbr.rel (0) target = $region21
    $region20: #{dqn_forward.1} parent=1 // pred_region
      _
    $region21: #{dqn_forward.1} parent=1 // pred_fallthru
      _
    // Predicated region
    $region22: #{dqn_forward.1} parent=1 // pred_check
      _
    $region23: #{dqn_forward.1} parent=1 // pred_check_branch
      %36 = sbr.rel (0) target = $region25
    $region24: #{dqn_forward.1} parent=1 // pred_region
      %38 = vsyncadd [#allocation5], 0
      %s39 = sshll.u32 %s5, 4
      %s40 = int_to_ptr.hbm [resolvable:$true] %s39
      %s41 = sshll.u32 [#allocation4], 4
      %s42 = int_to_ptr.vmem [resolvable:$true] %s41
      %47 = dma.hbm_to_vmem [thread:$0]  %s40, 1024, %s42, [#allocation5], 64, 64, 4
    $region25: #{dqn_forward.1} parent=1 // pred_fallthru
      _
    // Predicated region
    $region26: #{dqn_forward.1} parent=1 // pred_check
      _
    $region27: #{dqn_forward.1} parent=1 // pred_check_branch
      %49 = sbr.rel (0) target = $region29
    $region28: #{dqn_forward.1} parent=1 // pred_region
      _
    $region29: #{dqn_forward.1} parent=1 // pred_fallthru
      _
    // Predicated region
    $region30: #{dqn_forward.1} parent=1 // pred_check
      _
    $region31: #{dqn_forward.1} parent=1 // pred_check_branch
      %51 = sbr.rel (0) target = $region33
    $region32: #{dqn_forward.1} parent=1 // pred_region
      %53 = dma.done [#allocation3], 1024
    $region33: #{dqn_forward.1} parent=1 // pred_fallthru
      _
    // Predicated region
    $region34: #{dqn_forward.1} parent=1 // pred_check
      _
    $region35: #{dqn_forward.1} parent=1 // pred_check_branch
      %55 = sbr.rel (0) target = $region37
    $region36: #{dqn_forward.1} parent=1 // pred_region
      %57 = dma.done [#allocation5], 1024
    $region37: #{dqn_forward.1} parent=1 // pred_fallthru
      _
    %v59 = vld [vmem:[%s0] sm:$0xff]
    %v60 = vpack.c.bf16 %v59, %v59
    %v61 = vld [vmem:[%s1] sm:$0xf]
    %v62 = vld [vmem:[%s2] sm:$0x1]
    %v64 = vperm.slane %v62, 0
    %vm66 = vcmask 64512
    %v68 = vsel %vm66, %v60, 0
    %vm70 = vcmask 1043456
    %v72 = vsel %vm70, %v61, 0
    %74 = vmatpush.bf16.msra.mxu0 0
    %75 = vmatpush.bf16.msra.mxu0 0
    %76 = vmatpush.bf16.msra.mxu0 0
    %77 = vmatpush.bf16.msra.mxu0 0
    %78 = vmatpush.bf16.msra.mxu0 0
    %79 = vmatpush.bf16.msra.mxu0 0
    %80 = vmatpush.bf16.msra.mxu0 0
    %81 = vmatpush.bf16.msra.mxu0 %v72
    %82 = vmatmul.bf16.gmra.mxu0 %v68
    %v83 = vpop.f32.mrf.mxu0
    %v84 = vadd.f32 %v64, %v83
    %v85 = vpop.f32.mrf.mxu0
    %86 = vdwg.mxu0
    %v87 = vmax.f32 %v84, 0.0
    %v88 = vpack.c.bf16 %v87, %v87
    %v89 = vld [vmem:[#allocation2] sm:$0xf]
    %v90 = vld [vmem:[#allocation2 + $0x4] sm:$0xf]
    %v91 = vld [vmem:[#allocation2 + $0x8] sm:$0xf]
    %v92 = vld [vmem:[#allocation2 + $0xc] sm:$0xf]
    %v93 = vld [vmem:[#allocation2 + $0x10] sm:$0xf]
    %v94 = vld [vmem:[#allocation2 + $0x14] sm:$0xf]
    %v95 = vld [vmem:[#allocation2 + $0x18] sm:$0xf]
    %v96 = vld [vmem:[#allocation2 + $0x1c] sm:$0xf]
    %v97 = vld [vmem:[#allocation2 + $0x20] sm:$0xf]
    %v98 = vld [vmem:[#allocation2 + $0x24] sm:$0xf]
    %v99 = vld [vmem:[#allocation2 + $0x28] sm:$0xf]
    %v100 = vld [vmem:[#allocation2 + $0x2c] sm:$0xf]
    %v101 = vld [vmem:[#allocation2 + $0x30] sm:$0xf]
    %v102 = vld [vmem:[#allocation2 + $0x34] sm:$0xf]
    %v103 = vld [vmem:[#allocation2 + $0x38] sm:$0xf]
    %v104 = vld [vmem:[#allocation2 + $0x3c] sm:$0xf]
    %v105 = vld [vmem:[%s4] sm:$0x1]
    %v107 = vperm.slane %v105, 0
    %v125 = vunpack.c.l.b16 %v89
    %v126 = vunpack.c.l.b16 %v90
    %v127 = vunpack.c.l.b16 %v91
    %v128 = vunpack.c.l.b16 %v92
    %v129 = vunpack.c.l.b16 %v93
    %v130 = vunpack.c.l.b16 %v94
    %v131 = vunpack.c.l.b16 %v95
    %v132 = vunpack.c.l.b16 %v96
    %v133 = vunpack.c.l.b16 %v97
    %v134 = vunpack.c.l.b16 %v98
    %v135 = vunpack.c.l.b16 %v99
    %v136 = vunpack.c.l.b16 %v100
    %v137 = vunpack.c.l.b16 %v101
    %v138 = vunpack.c.l.b16 %v102
    %v139 = vunpack.c.l.b16 %v103
    %v140 = vunpack.c.l.b16 %v104
    %v141 = vpack.c.b16 %v126, %v125
    %v142 = vpack.c.b16 %v128, %v127
    %v143 = vpack.c.b16 %v130, %v129
    %v144 = vpack.c.b16 %v132, %v131
    %v145 = vpack.c.b16 %v134, %v133
    %v146 = vpack.c.b16 %v136, %v135
    %v147 = vpack.c.b16 %v138, %v137
    %v148 = vpack.c.b16 %v140, %v139
    %157 = vmatpush.bf16.msra.mxu0 %v148
    %158 = vmatpush.bf16.msra.mxu0 %v147
    %159 = vmatpush.bf16.msra.mxu0 %v146
    %160 = vmatpush.bf16.msra.mxu0 %v145
    %161 = vmatpush.bf16.msra.mxu0 %v144
    %162 = vmatpush.bf16.msra.mxu0 %v143
    %163 = vmatpush.bf16.msra.mxu0 %v142
    %164 = vmatpush.bf16.msra.mxu0 %v141
    %165 = vmatmul.bf16.gmra.mxu0 %v88
    %v166 = vpop.f32.mrf.mxu0
    %v167 = vadd.f32 %v107, %v166
    %v168 = vpop.f32.mrf.mxu0
    %169 = vdwg.mxu0
    %v170 = vmax.f32 %v167, 0.0
    %v171 = vpack.c.bf16 %v170, %v170
    %v172 = vld [vmem:[#allocation4] sm:$0xf]
    %v173 = vld [vmem:[#allocation4 + $0x4] sm:$0xf]
    %v174 = vld [vmem:[#allocation4 + $0x8] sm:$0xf]
    %v175 = vld [vmem:[#allocation4 + $0xc] sm:$0xf]
    %v176 = vld [vmem:[#allocation4 + $0x10] sm:$0xf]
    %v177 = vld [vmem:[#allocation4 + $0x14] sm:$0xf]
    %v178 = vld [vmem:[#allocation4 + $0x18] sm:$0xf]
    %v179 = vld [vmem:[#allocation4 + $0x1c] sm:$0xf]
    %v180 = vld [vmem:[#allocation4 + $0x20] sm:$0xf]
    %v181 = vld [vmem:[#allocation4 + $0x24] sm:$0xf]
    %v182 = vld [vmem:[#allocation4 + $0x28] sm:$0xf]
    %v183 = vld [vmem:[#allocation4 + $0x2c] sm:$0xf]
    %v184 = vld [vmem:[#allocation4 + $0x30] sm:$0xf]
    %v185 = vld [vmem:[#allocation4 + $0x34] sm:$0xf]
    %v186 = vld [vmem:[#allocation4 + $0x38] sm:$0xf]
    %v187 = vld [vmem:[#allocation4 + $0x3c] sm:$0xf]
    %v188 = vld [vmem:[%s6] sm:$0x1]
    %v190 = vperm.slane %v188, 0
    %v208 = vunpack.c.l.b16 %v172
    %v209 = vunpack.c.l.b16 %v173
    %v210 = vunpack.c.l.b16 %v174
    %v211 = vunpack.c.l.b16 %v175
    %v212 = vunpack.c.l.b16 %v176
    %v213 = vunpack.c.l.b16 %v177
    %v214 = vunpack.c.l.b16 %v178
    %v215 = vunpack.c.l.b16 %v179
    %v216 = vunpack.c.l.b16 %v180
    %v217 = vunpack.c.l.b16 %v181
    %v218 = vunpack.c.l.b16 %v182
    %v219 = vunpack.c.l.b16 %v183
    %v220 = vunpack.c.l.b16 %v184
    %v221 = vunpack.c.l.b16 %v185
    %v222 = vunpack.c.l.b16 %v186
    %v223 = vunpack.c.l.b16 %v187
    %v224 = vpack.c.b16 %v209, %v208
    %v225 = vpack.c.b16 %v211, %v210
    %v226 = vpack.c.b16 %v213, %v212
    %v227 = vpack.c.b16 %v215, %v214
    %v228 = vpack.c.b16 %v217, %v216
    %v229 = vpack.c.b16 %v219, %v218
    %v230 = vpack.c.b16 %v221, %v220
    %v231 = vpack.c.b16 %v223, %v222
    %240 = vmatpush.bf16.msra.mxu0 %v231
    %241 = vmatpush.bf16.msra.mxu0 %v230
    %242 = vmatpush.bf16.msra.mxu0 %v229
    %243 = vmatpush.bf16.msra.mxu0 %v228
    %244 = vmatpush.bf16.msra.mxu0 %v227
    %245 = vmatpush.bf16.msra.mxu0 %v226
    %246 = vmatpush.bf16.msra.mxu0 %v225
    %247 = vmatpush.bf16.msra.mxu0 %v224
    %248 = vmatmul.bf16.gmra.mxu0 %v171
    %v249 = vpop.f32.mrf.mxu0
    %v250 = vadd.f32 %v190, %v249
    %v251 = vpop.f32.mrf.mxu0
    %252 = vdwg.mxu0
    %253 = vst [vmem:[%s7] sm:$0xff] %v250
    // Predicated region
    $region38: #{dqn_forward.1} parent=1 // pred_check
      _
    $region39: #{dqn_forward.1} parent=1 // pred_check_branch
      %255 = sbr.rel (0) target = $region41
    $region40: #{dqn_forward.1} parent=1 // pred_region
      _
    $region41: #{dqn_forward.1} parent=1 // pred_fallthru
      _
    // Predicated region
    $region42: #{dqn_forward.1} parent=1 // pred_check
      _
    $region43: #{dqn_forward.1} parent=1 // pred_check_branch
      %257 = sbr.rel (0) target = $region45
    $region44: #{dqn_forward.1} parent=1 // pred_region
      _
    $region45: #{dqn_forward.1} parent=1 // pred_fallthru
      _
    %258 = vsyncpa [#allocation3], 1
    %259 = vsyncpa [#allocation5], 1

</llo_original>
